<compile_context>
chip_gen: v6e
topology: v6e:2x2x1
jax: 0.10.0
libtpu: 0.0.40
codegen_flags: <defaults>
</compile_context>

<pallas_src>
import jax
import jax.numpy as jnp
from jax.experimental import pallas as pl
from jax.experimental.pallas import tpu as pltpu

LANES = 128
SUBLANES = 8
MAX_BLOCK_ROWS = 512  # 512x128xf32 = 256 KiB per tile -> well under scoped VMEM


def _skipnn_kernel(p_ref, x_ref, o0_ref, o1_ref):
    # Hoist the 8 scalar params (SMEM reads are essentially free).
    w1 = p_ref[0]
    b1 = p_ref[1]
    w2 = p_ref[2]
    b2 = p_ref[3]
    w30 = p_ref[4]
    w31 = p_ref[5]
    b30 = p_ref[6]
    b31 = p_ref[7]

    x = x_ref[...]                                    # (block_rows, 128), batch on lanes
    h1 = jnp.maximum(x * w1 + b1, 0.0)                # fc1 + ReLU (fan_in = 1)
    h2 = jnp.maximum(h1 * w2 + b2, 0.0)               # fc2 + ReLU
    o0_ref[...] = jnp.maximum(h2 * w30 + b30, 0.0)    # fc3 out feature 0 + ReLU
    o1_ref[...] = jnp.maximum(h2 * w31 + b31, 0.0)    # fc3 out feature 1 + ReLU


def skipnn_forward(x, params):
    """x: [B, 1] float32. params: dict of (weight, bias) per layer, PyTorch layout."""
    B = x.shape[0]
    (w1, b1), (w2, b2), (w3, b3) = params["fc1"], params["fc2"], params["fc3"]

    # All scalar parameters packed into one SMEM vector:
    # [w1, b1, w2, b2, w3_0, w3_1, b3_0, b3_1]
    p = jnp.concatenate([
        w1.reshape(-1), b1.reshape(-1),
        w2.reshape(-1), b2.reshape(-1),
        w3.reshape(-1), b3.reshape(-1),
    ]).astype(jnp.float32)

    # Batch-on-lanes layout: flatten [B] -> pad -> [rows, 128].
    rows_needed = -(-B // LANES)
    if rows_needed >= MAX_BLOCK_ROWS:
        block_rows = MAX_BLOCK_ROWS
    else:
        block_rows = max(SUBLANES,
                         ((rows_needed + SUBLANES - 1) // SUBLANES) * SUBLANES)
    rows = ((rows_needed + block_rows - 1) // block_rows) * block_rows
    Bp = rows * LANES

    x_slab = jnp.zeros((Bp,), jnp.float32).at[:B].set(
        x.reshape(-1).astype(jnp.float32))
    x_slab = x_slab.reshape(rows, LANES)

    tile_spec = pl.BlockSpec((block_rows, LANES), lambda i: (i, 0))
    out0, out1 = pl.pallas_call(
        _skipnn_kernel,
        out_shape=(
            jax.ShapeDtypeStruct((rows, LANES), jnp.float32),
            jax.ShapeDtypeStruct((rows, LANES), jnp.float32),
        ),
        grid=(rows // block_rows,),
        in_specs=[
            pl.BlockSpec(memory_space=pltpu.MemorySpace.SMEM),  # 8 scalars
            tile_spec,                                          # batch slab tile
        ],
        out_specs=(tile_spec, tile_spec),
        compiler_params=pltpu.CompilerParams(
            dimension_semantics=("parallel",)),
    )(p, x_slab)

    # Valid outputs: first B lane-elements of each plane -> [B, 2].
    y0 = out0.reshape(Bp)[:B]
    y1 = out1.reshape(Bp)[:B]
    return jnp.stack([y0, y1], axis=1)


def init_params(key):
    """Deterministic init mimicking torch.nn.Linear (U(-1/sqrt(fan_in), +))."""
    def linear(key, in_f, out_f):
        kw, kb = jax.random.split(key)
        bound = 1.0 / (in_f ** 0.5)
        w = jax.random.uniform(kw, (out_f, in_f), jnp.float32, -bound, bound)
        b = jax.random.uniform(kb, (out_f,), jnp.float32, -bound, bound)
        return w, b

    k1, k2, k3 = jax.random.split(key, 3)
    return {
        "fc1": linear(k1, 1, 1),
        "fc2": linear(k2, 1, 1),
        "fc3": linear(k3, 1, 2),
    }


def reference_forward(x, params):
    (w1, b1), (w2, b2), (w3, b3) = params["fc1"], params["fc2"], params["fc3"]
    h = jnp.maximum(x @ w1.T + b1, 0.0)
    h = jnp.maximum(h @ w2.T + b2, 0.0)
    return jnp.maximum(h @ w3.T + b3, 0.0)


if __name__ == "__main__":
    key = jax.random.PRNGKey(0)
    kp, kx = jax.random.split(key)
    params = init_params(kp)

    batch = 8
    x = jax.random.normal(kx, (batch, 1), jnp.float32)

    out = skipnn_forward(x, params)
    out = jax.block_until_ready(out)

    ref = reference_forward(x, params)
    assert out.shape == (batch, 2), out.shape
    assert jnp.allclose(out, ref, atol=1e-5, rtol=1e-5), (out, ref)
    print("KERNEL_OK")
</pallas_src>

<mosaic_0001>
module attributes {stable_mosaic.version = 11 : i64} {
  func.func @_skipnn_kernel(%arg0: i32, %arg1: memref<8xf32, #tpu.memory_space<smem>>, %arg2: memref<8x128xf32, #tpu.memory_space<vmem>>, %arg3: memref<8x128xf32, #tpu.memory_space<vmem>>, %arg4: memref<8x128xf32, #tpu.memory_space<vmem>>) attributes {dimension_semantics = [#tpu.dimension_semantics<parallel>], iteration_bounds = array<i64: 1>, scalar_prefetch = 0 : i64, scratch_operands = 0 : i64, tpu.core_type = #tpu.core_type<tc>, window_params = [{transform_indices = @transform_0, window_bounds = array<i64: 8>}, {transform_indices = @transform_1, window_bounds = array<i64: 8, 128>}, {transform_indices = @transform_2, window_bounds = array<i64: 8, 128>}, {transform_indices = @transform_3, window_bounds = array<i64: 8, 128>}]} {
    %c0 = arith.constant 0 : index
    %0 = memref.load %arg1[%c0] : memref<8xf32, #tpu.memory_space<smem>>
    %c1 = arith.constant 1 : index
    %1 = memref.load %arg1[%c1] : memref<8xf32, #tpu.memory_space<smem>>
    %c2 = arith.constant 2 : index
    %2 = memref.load %arg1[%c2] : memref<8xf32, #tpu.memory_space<smem>>
    %c3 = arith.constant 3 : index
    %3 = memref.load %arg1[%c3] : memref<8xf32, #tpu.memory_space<smem>>
    %c4 = arith.constant 4 : index
    %4 = memref.load %arg1[%c4] : memref<8xf32, #tpu.memory_space<smem>>
    %c5 = arith.constant 5 : index
    %5 = memref.load %arg1[%c5] : memref<8xf32, #tpu.memory_space<smem>>
    %c6 = arith.constant 6 : index
    %6 = memref.load %arg1[%c6] : memref<8xf32, #tpu.memory_space<smem>>
    %c7 = arith.constant 7 : index
    %7 = memref.load %arg1[%c7] : memref<8xf32, #tpu.memory_space<smem>>
    %c0_0 = arith.constant 0 : index
    %c0_1 = arith.constant 0 : index
    %8 = vector.load %arg2[%c0_0, %c0_1] : memref<8x128xf32, #tpu.memory_space<vmem>>, vector<8x128xf32>
    %9 = vector.broadcast %0 : f32 to vector<8x128xf32>
    %10 = arith.mulf %8, %9 : vector<8x128xf32>
    %11 = vector.broadcast %1 : f32 to vector<8x128xf32>
    %12 = arith.addf %10, %11 : vector<8x128xf32>
    %cst = arith.constant 0.000000e+00 : f32
    %13 = vector.broadcast %cst : f32 to vector<8x128xf32>
    %14 = arith.maximumf %12, %13 : vector<8x128xf32>
    %15 = vector.broadcast %2 : f32 to vector<8x128xf32>
    %16 = arith.mulf %14, %15 : vector<8x128xf32>
    %17 = vector.broadcast %3 : f32 to vector<8x128xf32>
    %18 = arith.addf %16, %17 : vector<8x128xf32>
    %cst_2 = arith.constant 0.000000e+00 : f32
    %19 = vector.broadcast %cst_2 : f32 to vector<8x128xf32>
    %20 = arith.maximumf %18, %19 : vector<8x128xf32>
    %21 = vector.broadcast %4 : f32 to vector<8x128xf32>
    %22 = arith.mulf %20, %21 : vector<8x128xf32>
    %23 = vector.broadcast %6 : f32 to vector<8x128xf32>
    %24 = arith.addf %22, %23 : vector<8x128xf32>
    %cst_3 = arith.constant 0.000000e+00 : f32
    %25 = vector.broadcast %cst_3 : f32 to vector<8x128xf32>
    %26 = arith.maximumf %24, %25 : vector<8x128xf32>
    %c0_4 = arith.constant 0 : index
    %c0_5 = arith.constant 0 : index
    %27 = vector.load %arg3[%c0_4, %c0_5] : memref<8x128xf32, #tpu.memory_space<vmem>>, vector<8x128xf32>
    tpu.vector_store %arg3[%c0_4, %c0_5], %26 {strides = array<i32>} : memref<8x128xf32, #tpu.memory_space<vmem>>, vector<8x128xf32>,
    %28 = vector.broadcast %5 : f32 to vector<8x128xf32>
    %29 = arith.mulf %20, %28 : vector<8x128xf32>
    %30 = vector.broadcast %7 : f32 to vector<8x128xf32>
    %31 = arith.addf %29, %30 : vector<8x128xf32>
    %cst_6 = arith.constant 0.000000e+00 : f32
    %32 = vector.broadcast %cst_6 : f32 to vector<8x128xf32>
    %33 = arith.maximumf %31, %32 : vector<8x128xf32>
    %c0_7 = arith.constant 0 : index
    %c0_8 = arith.constant 0 : index
    %34 = vector.load %arg4[%c0_7, %c0_8] : memref<8x128xf32, #tpu.memory_space<vmem>>, vector<8x128xf32>
    tpu.vector_store %arg4[%c0_7, %c0_8], %33 {strides = array<i32>} : memref<8x128xf32, #tpu.memory_space<vmem>>, vector<8x128xf32>,
    return
  }
  func.func @transform_0(%arg0: i32) -> i32 {
    %c0_i32 = arith.constant 0 : i32
    %c0_i32_0 = arith.constant 0 : i32
    return %c0_i32 : i32
  }
  func.func @transform_1(%arg0: i32) -> (i32, i32) {
    %c0_i32 = arith.constant 0 : i32
    %c0_i32_0 = arith.constant 0 : i32
    return %arg0, %c0_i32 : i32, i32
  }
  func.func @transform_2(%arg0: i32) -> (i32, i32) {
    %c0_i32 = arith.constant 0 : i32
    %c0_i32_0 = arith.constant 0 : i32
    return %arg0, %c0_i32 : i32, i32
  }
  func.func @transform_3(%arg0: i32) -> (i32, i32) {
    %c0_i32 = arith.constant 0 : i32
    %c0_i32_0 = arith.constant 0 : i32
    return %arg0, %c0_i32 : i32, i32
  }
}

</mosaic_0001>

<llo_original>
// kernel: tpu_custom_call.1
$region0: #{tpu_custom_call.1}
  #allocation0 [shape = 'u32[]', space=smem, size = 0x4, offset = 0x4, fixed_abs, tag = 'smem constant byte address 0x4 - core index']
  #allocation1 [shape = 'u32[144,128]{1,0:T(1,128)}', space=vmem, size = 0x12000, scoped, tag = 'internal scratch']
  %s0 = inlined_call_operand.hbm [shape: f32[8], index: 0, kind: input, shape index: {}]
  %s1 = inlined_call_operand.hbm [shape: f32[8,128], index: 1, kind: input, shape index: {}]
  %s2 = inlined_call_operand.hbm [shape: f32[8,128], index: 2, kind: output, shape index: {0}]
  %s3 = inlined_call_operand.hbm [shape: f32[8,128], index: 3, kind: output, shape index: {1}]
  %4 = xla_tuple %s2, %s3
  %s5 = sld [smem:[#allocation0]]
  $region34: #{tpu_custom_call.1} parent=0
    _
  %s7 = ssub.s32 1, %s5
  %s8 = scalar_select 0, %s7, %s5
  $region1: #{tpu_custom_call.1} parent=0
    #allocation2 [shape = 'u8[512]{0}', space=smem, size = 0x200, scoped, tag = 'input window, operand 0, single buffered']
    #allocation3 [shape = 's32[1]{0}', space=sflag, size = 0x4, scoped, tag = 'scoped memory for tpu_custom_call.1']
    #allocation4 [shape = 's32[1]{0}', space=sflag, size = 0x4, scoped, tag = 'scoped memory for tpu_custom_call.1']
    #allocation5 [shape = 's32[1]{0}', space=sflag, size = 0x4, scoped, tag = 'scoped memory for tpu_custom_call.1']
    #allocation6 [shape = 'u8[4096]{0}', space=vmem, size = 0x1000, scoped, tag = 'input window, operand 1, single buffered']
    #allocation7 [shape = 'u8[4096]{0}', space=vmem, size = 0x1000, scoped, tag = 'output window, operand 0, single buffered']
    #allocation8 [shape = 'u8[4096]{0}', space=vmem, size = 0x1000, scoped, tag = 'output window, operand 1, single buffered']
    #allocation9 [shape = 's32[1]{0}', space=sflag, size = 0x4, scoped, tag = 'scoped memory for tpu_custom_call.1']
    %9 = vsyncpa [#allocation5], 0
    %10 = vsyncpa [#allocation3], 0
    %11 = vsyncpa [#allocation4], 0
    %12 = vsyncpa [#allocation9], 0
    // Predicated region
    $region2: #{tpu_custom_call.1} parent=1 // pred_check
      _
    $region3: #{tpu_custom_call.1} parent=1 // pred_check_branch
      %14 = sbr.rel (0) target = $region5
    $region4: #{tpu_custom_call.1} parent=1 // pred_region
      %s16 = ssub.s32 16, 16
      %17 = vsyncadd [#allocation5], %s16
      %20 = dma.hbm_to_smem %s0, 16, [#allocation2], [#allocation5]
    $region5: #{tpu_custom_call.1} parent=1 // pred_fallthru
      _
    // Predicated region
    $region6: #{tpu_custom_call.1} parent=1 // pred_check
      _
    $region7: #{tpu_custom_call.1} parent=1 // pred_check_branch
      %22 = sbr.rel (0) target = $region9
    $region8: #{tpu_custom_call.1} parent=1 // pred_region
      %s24 = ssub.s32 128, 128
      %25 = vsyncadd [#allocation3], %s24
      %s27 = sshll.u32 [#allocation6], 4
      %s28 = int_to_ptr.vmem [resolvable:$true] %s27
      %30 = dma.hbm_to_vmem [thread:$0]  %s1, 128, %s28, [#allocation3]
    $region9: #{tpu_custom_call.1} parent=1 // pred_fallthru
      _
    // Predicated region
    $region10: #{tpu_custom_call.1} parent=1 // pred_check
      _
    $region11: #{tpu_custom_call.1} parent=1 // pred_check_branch
      %32 = sbr.rel (0) target = $region13
    $region12: #{tpu_custom_call.1} parent=1 // pred_region
      %33 = dma.done [#allocation5], 16
    $region13: #{tpu_custom_call.1} parent=1 // pred_fallthru
      _
    // Predicated region
    $region14: #{tpu_custom_call.1} parent=1 // pred_check
      _
    $region15: #{tpu_custom_call.1} parent=1 // pred_check_branch
      %35 = sbr.rel (0) target = $region17
    $region16: #{tpu_custom_call.1} parent=1 // pred_region
      %36 = dma.done [#allocation3], 128
    $region17: #{tpu_custom_call.1} parent=1 // pred_fallthru
      _
    %37 = sfence
    %s38 = sld [smem:[#allocation2]]
    %s39 = sld [smem:[#allocation2 + $0x1]]
    %s40 = sld [smem:[#allocation2 + $0x2]]
    %s41 = sld [smem:[#allocation2 + $0x3]]
    %s42 = sld [smem:[#allocation2 + $0x4]]
    %s43 = sld [smem:[#allocation2 + $0x5]]
    %s44 = sld [smem:[#allocation2 + $0x6]]
    %s45 = sld [smem:[#allocation2 + $0x7]]
    %v46 = vld [vmem:[#allocation6] sm:$0xff]
    %v47 = vstv %s38
    %v48 = vmul.f32 %v46, %v47
    %v49 = vstv %s39
    %v50 = vadd.f32 %v48, %v49
    %v51 = vmax.f32 %v50, 0.0
    %v52 = vstv %s40
    %v53 = vmul.f32 %v51, %v52
    %v54 = vstv %s41
    %v55 = vadd.f32 %v53, %v54
    %v56 = vmax.f32 %v55, 0.0
    %v57 = vstv %s42
    %v58 = vmul.f32 %v56, %v57
    %v59 = vstv %s44
    %v60 = vadd.f32 %v58, %v59
    %v61 = vmax.f32 %v60, 0.0
    %62 = vst [vmem:[#allocation7] sm:$0xff] %v61
    %v63 = vstv %s43
    %v64 = vmul.f32 %v56, %v63
    %v65 = vstv %s45
    %v66 = vadd.f32 %v64, %v65
    %v67 = vmax.f32 %v66, 0.0
    %68 = vst [vmem:[#allocation8] sm:$0xff] %v67
    // Predicated region
    $region18: #{tpu_custom_call.1} parent=1 // pred_check
      _
    $region19: #{tpu_custom_call.1} parent=1 // pred_check_branch
      %70 = sbr.rel (0) target = $region21
    $region20: #{tpu_custom_call.1} parent=1 // pred_region
      %s72 = ssub.s32 128, 128
      %73 = vsyncadd [#allocation4], %s72
      %s75 = sshll.u32 [#allocation7], 4
      %s76 = int_to_ptr.vmem [resolvable:$true] %s75
      %78 = dma.vmem_to_hbm [thread:$0]  %s76, 128, %s2, [#allocation4]
    $region21: #{tpu_custom_call.1} parent=1 // pred_fallthru
      _
    // Predicated region
    $region22: #{tpu_custom_call.1} parent=1 // pred_check
      _
    $region23: #{tpu_custom_call.1} parent=1 // pred_check_branch
      %80 = sbr.rel (0) target = $region25
    $region24: #{tpu_custom_call.1} parent=1 // pred_region
      %s82 = ssub.s32 128, 128
      %83 = vsyncadd [#allocation9], %s82
      %s85 = sshll.u32 [#allocation8], 4
      %s86 = int_to_ptr.vmem [resolvable:$true] %s85
      %88 = dma.vmem_to_hbm [thread:$0]  %s86, 128, %s3, [#allocation9]
    $region25: #{tpu_custom_call.1} parent=1 // pred_fallthru
      _
    // Predicated region
    $region26: #{tpu_custom_call.1} parent=1 // pred_check
      _
    $region27: #{tpu_custom_call.1} parent=1 // pred_check_branch
      %90 = sbr.rel (0) target = $region29
    $region28: #{tpu_custom_call.1} parent=1 // pred_region
      %91 = dma.done [#allocation4], 128
    $region29: #{tpu_custom_call.1} parent=1 // pred_fallthru
      _
    // Predicated region
    $region30: #{tpu_custom_call.1} parent=1 // pred_check
      _
    $region31: #{tpu_custom_call.1} parent=1 // pred_check_branch
      %93 = sbr.rel (0) target = $region33
    $region32: #{tpu_custom_call.1} parent=1 // pred_region
      %94 = dma.done [#allocation9], 128
    $region33: #{tpu_custom_call.1} parent=1 // pred_fallthru
      _
    %95 = vsyncpa [#allocation3], 1
    %96 = vsyncpa [#allocation4], 1
    %97 = vsyncpa [#allocation9], 1
    %98 = vsyncpa [#allocation5], 1

</llo_original>
